<compile_context>
chip_gen: v5e
topology: v5e:2x2
jax: 0.10.0
libtpu: 0.0.40
codegen_flags: <defaults>
</compile_context>

<pallas_src>
import jax
import jax.numpy as jnp
from jax.experimental import pallas as pl
from jax.experimental.pallas import tpu as pltpu


def mlp_kernel(x_ref, w1_ref, b1_ref, w2_ref, b2_ref, o_ref):
    # x_ref:  (4,  TB)  compute dtype (bf16 by default), batch on lanes
    # w1_ref: (10, 4)   compute dtype
    # b1_ref: (10, 1)   f32
    # w2_ref: (3,  10)  compute dtype
    # b2_ref: (3,  1)   f32
    # o_ref:  (3,  TB)  out dtype (f32 by default)
    x = x_ref[...]
    w1 = w1_ref[...]
    w2 = w2_ref[...]

    # fc1 + ReLU.  f32 accumulation on the MXU; the matmuls are tiny (K=4/10)
    # and fully hidden under the HBM DMA of the next batch tile.
    # (Optional v5e micro-opt per review: unrolled VPU broadcast-FMAs instead
    #  of the MXU -- only worth it if profiling shows the MXU path exposed.)
    h = jnp.dot(w1, x, preferred_element_type=jnp.float32) + b1_ref[...]
    h = jnp.maximum(h, 0.0).astype(w2.dtype)

    # fc2
    y = jnp.dot(w2, h, preferred_element_type=jnp.float32) + b2_ref[...]
    o_ref[...] = y.astype(o_ref.dtype)


def _round_up(v, m):
    return ((v + m - 1) // m) * m


def net_forward(x, w1, b1, w2, b2, *,
                max_batch_tile=64 * 1024,      # lanes per grid step (VMEM-safe cap)
                min_split_tile=32 * 1024,      # don't split batches below this
                target_parallel_steps=4,       # keep >=2 (ideally 4) steps for v7x's 2 TCs
                compute_dtype=jnp.bfloat16,    # x/W1/W2/h narrowing (f32 accumulation)
                out_dtype=jnp.float32,         # bf16 halves the logits writeback
                batch_major_output=True):
    """Forward pass of Net.

    x: (B, 4) f32 (PyTorch row-major convention)
    w1: (10, 4), b1: (10,), w2: (3, 10), b2: (3,)  -- PyTorch (out, in) layout
    Returns (B, 3) logits by default; (3, B) lane-dense logits if
    batch_major_output=False (lets the consumer fuse away the transpose).
    """
    assert max_batch_tile % 128 == 0 and min_split_tile % 128 == 0
    B, in_dim = x.shape
    hid_dim = w1.shape[0]
    out_dim = w2.shape[0]

    # ---- Batch-tile policy (review item #1/#2) ------------------------------
    # Single step for small batches; for large batches, tiles of up to
    # `max_batch_tile` lanes, balanced so the "parallel" grid keeps
    # >= target_parallel_steps steps (v7x megacore) with minimal padding.
    b128 = _round_up(B, 128)
    tb0 = min(b128, max_batch_tile,
              max(min_split_tile,
                  _round_up(pl.cdiv(b128, target_parallel_steps), 128)))
    tb0 = max(tb0, 128)
    steps = pl.cdiv(b128, tb0)
    tb = _round_up(pl.cdiv(b128, steps), 128)   # re-balance tile across steps
    b_pad = steps * tb

    # ---- Layout plumbing: features -> sublanes, batch -> lanes --------------
    # One fused XLA cast+transpose(+pad) pass; cheaper than narrow-minor-dim
    # VMEM blocks / masked stores inside the kernel (see header comment).
    xt = x.astype(compute_dtype).T                        # (4, B)
    if b_pad != B:
        xt = jnp.pad(xt, ((0, 0), (0, b_pad - B)))

    w1c = w1.astype(compute_dtype)                        # (10, 4)
    w2c = w2.astype(compute_dtype)                        # (3, 10)
    b1c = b1.reshape(hid_dim, 1).astype(jnp.float32)      # (10, 1)
    b2c = b2.reshape(out_dim, 1).astype(jnp.float32)      # (3, 1)

    out_t = pl.pallas_call(
        mlp_kernel,
        out_shape=jax.ShapeDtypeStruct((out_dim, b_pad), out_dtype),
        grid=(steps,),
        in_specs=[
            pl.BlockSpec((in_dim, tb), lambda i: (0, i)),        # x: marches over batch
            pl.BlockSpec((hid_dim, in_dim), lambda i: (0, 0)),   # W1 resident
            pl.BlockSpec((hid_dim, 1), lambda i: (0, 0)),        # b1 resident
            pl.BlockSpec((out_dim, hid_dim), lambda i: (0, 0)),  # W2 resident
            pl.BlockSpec((out_dim, 1), lambda i: (0, 0)),        # b2 resident
        ],
        out_specs=pl.BlockSpec((out_dim, tb), lambda i: (0, i)),
        compiler_params=pltpu.CompilerParams(
            # Independent batch tiles: shards across the 2 TensorCores on v7x.
            dimension_semantics=("parallel",),
            # <= ~48 MiB stays per-TC-safe on v7x (64 MiB VMEM); worst-case
            # usage at tb=65536 is ~20 MiB.  On v5e/v6e (128 MiB) this could be
            # raised together with max_batch_tile if even bigger tiles are wanted.
            vmem_limit_bytes=48 * 1024 * 1024,
        ),
    )(xt, w1c, b1c, w2c, b2c)

    logits_t = out_t[:, :B]                                # (3, B), lane-dense
    if batch_major_output:
        # PyTorch-layout logits.  If the consumer can take (3, B) directly
        # (argmax/loss over axis 0), call with batch_major_output=False to
        # skip this XLA transpose pass entirely.
        return logits_t.T                                  # (B, 3)
    return logits_t


def reference_forward(x, w1, b1, w2, b2, compute_dtype=jnp.bfloat16):
    """Pure-JAX mirror of the kernel's mixed-precision forward."""
    xc = x.astype(compute_dtype)
    w1c = w1.astype(compute_dtype)
    w2c = w2.astype(compute_dtype)
    h = jnp.dot(xc, w1c.T, preferred_element_type=jnp.float32) + b1
    h = jnp.maximum(h, 0.0).astype(compute_dtype)
    return jnp.dot(h, w2c.T, preferred_element_type=jnp.float32) + b2


def init_params(key):
    # Mimic PyTorch's U(-1/sqrt(fan_in), +1/sqrt(fan_in)) init, (out, in) layout.
    k1, k2, k3, k4 = jax.random.split(key, 4)
    bound1 = 1.0 / jnp.sqrt(4.0)
    bound2 = 1.0 / jnp.sqrt(10.0)
    w1 = jax.random.uniform(k1, (10, 4), jnp.float32, -bound1, bound1)
    b1 = jax.random.uniform(k2, (10,), jnp.float32, -bound1, bound1)
    w2 = jax.random.uniform(k3, (3, 10), jnp.float32, -bound2, bound2)
    b2 = jax.random.uniform(k4, (3,), jnp.float32, -bound2, bound2)
    return w1, b1, w2, b2


if __name__ == "__main__":
    key = jax.random.PRNGKey(0)
    kx, kp = jax.random.split(key)

    # Iris-sized input: 150 samples x 4 features.  Small batch -> single grid step.
    B = 150
    x = jax.random.normal(kx, (B, 4), dtype=jnp.float32)
    w1, b1, w2, b2 = init_params(kp)

    out = net_forward(x, w1, b1, w2, b2)
    out = jax.block_until_ready(out)
    assert out.shape == (B, 3)

    # Exact-mirror reference (same bf16 inputs / f32 accumulation).
    ref = reference_forward(x, w1, b1, w2, b2)
    assert jnp.allclose(out, ref, atol=1e-4, rtol=1e-4), (
        float(jnp.max(jnp.abs(out - ref))))

    # Loose sanity check against the pure-f32 PyTorch-equivalent forward
    # (tolerance reflects the intentional bf16 narrowing of x/W1/W2/h).
    ref_f32 = jnp.maximum(x @ w1.T + b1, 0.0) @ w2.T + b2
    assert jnp.allclose(out, ref_f32, atol=0.25, rtol=0.25)

    # Exercise the multi-step "parallel" grid + padded-tail path with tiny
    # tile overrides (correctness check of the index_map / pad / slice logic).
    B2 = 1000
    x2 = jax.random.normal(kx, (B2, 4), dtype=jnp.float32)
    out2 = jax.block_until_ready(
        net_forward(x2, w1, b1, w2, b2,
                    max_batch_tile=256, min_split_tile=128,
                    target_parallel_steps=4))
    ref2 = reference_forward(x2, w1, b1, w2, b2)
    assert out2.shape == (B2, 3)
    assert jnp.allclose(out2, ref2, atol=1e-4, rtol=1e-4)

    print("KERNEL_OK")
</pallas_src>

<mosaic_0001>
module attributes {stable_mosaic.version = 11 : i64} {
  func.func @mlp_kernel(%arg0: i32, %arg1: memref<4x256xbf16, #tpu.memory_space<vmem>>, %arg2: memref<10x4xbf16, #tpu.memory_space<vmem>>, %arg3: memref<10x1xf32, #tpu.memory_space<vmem>>, %arg4: memref<3x10xbf16, #tpu.memory_space<vmem>>, %arg5: memref<3x1xf32, #tpu.memory_space<vmem>>, %arg6: memref<3x256xf32, #tpu.memory_space<vmem>>) attributes {dimension_semantics = [#tpu.dimension_semantics<parallel>], iteration_bounds = array<i64: 1>, scalar_prefetch = 0 : i64, scratch_operands = 0 : i64, tpu.core_type = #tpu.core_type<tc>, window_params = [{transform_indices = @transform_0, window_bounds = array<i64: 4, 256>}, {pipeline_mode = #tpu.pipeline_mode<synchronous>, transform_indices = @transform_1, window_bounds = array<i64: 10, 4>}, {pipeline_mode = #tpu.pipeline_mode<synchronous>, transform_indices = @transform_2, window_bounds = array<i64: 10, 1>}, {pipeline_mode = #tpu.pipeline_mode<synchronous>, transform_indices = @transform_3, window_bounds = array<i64: 3, 10>}, {pipeline_mode = #tpu.pipeline_mode<synchronous>, transform_indices = @transform_4, window_bounds = array<i64: 3, 1>}, {transform_indices = @transform_5, window_bounds = array<i64: 3, 256>}]} {
    %c0 = arith.constant 0 : index
    %c0_0 = arith.constant 0 : index
    %0 = vector.load %arg1[%c0, %c0_0] : memref<4x256xbf16, #tpu.memory_space<vmem>>, vector<4x256xbf16>
    %c0_1 = arith.constant 0 : index
    %c0_2 = arith.constant 0 : index
    %1 = vector.load %arg2[%c0_1, %c0_2] : memref<10x4xbf16, #tpu.memory_space<vmem>>, vector<10x4xbf16>
    %c0_3 = arith.constant 0 : index
    %c0_4 = arith.constant 0 : index
    %2 = vector.load %arg4[%c0_3, %c0_4] : memref<3x10xbf16, #tpu.memory_space<vmem>>, vector<3x10xbf16>
    %cst = arith.constant dense<0.000000e+00> : vector<10x256xf32>
    %3 = tpu.matmul %1, %0, %cst {dimension_numbers = #tpu.dot_dimension_numbers<[1], [0], [0], [1], [0, 0, 1, 1], [], []>} : vector<10x4xbf16>, vector<4x256xbf16>, vector<10x256xf32> -> vector<10x256xf32>
    %c0_5 = arith.constant 0 : index
    %c0_6 = arith.constant 0 : index
    %4 = vector.load %arg3[%c0_5, %c0_6] : memref<10x1xf32, #tpu.memory_space<vmem>>, vector<10x1xf32>
    %5 = vector.broadcast %4 : vector<10x1xf32> to vector<10x256xf32>
    %6 = arith.addf %3, %5 : vector<10x256xf32>
    %cst_7 = arith.constant 0.000000e+00 : f32
    %7 = vector.broadcast %cst_7 : f32 to vector<10x256xf32>
    %8 = arith.maximumf %6, %7 : vector<10x256xf32>
    %9 = arith.truncf %8 : vector<10x256xf32> to vector<10x256xbf16>
    %cst_8 = arith.constant dense<0.000000e+00> : vector<3x256xf32>
    %10 = tpu.matmul %2, %9, %cst_8 {dimension_numbers = #tpu.dot_dimension_numbers<[1], [0], [0], [1], [0, 0, 1, 1], [], []>} : vector<3x10xbf16>, vector<10x256xbf16>, vector<3x256xf32> -> vector<3x256xf32>
    %c0_9 = arith.constant 0 : index
    %c0_10 = arith.constant 0 : index
    %11 = vector.load %arg5[%c0_9, %c0_10] : memref<3x1xf32, #tpu.memory_space<vmem>>, vector<3x1xf32>
    %12 = vector.broadcast %11 : vector<3x1xf32> to vector<3x256xf32>
    %13 = arith.addf %10, %12 : vector<3x256xf32>
    %c0_11 = arith.constant 0 : index
    %c0_12 = arith.constant 0 : index
    %14 = vector.load %arg6[%c0_11, %c0_12] : memref<3x256xf32, #tpu.memory_space<vmem>>, vector<3x256xf32>
    tpu.vector_store %arg6[%c0_11, %c0_12], %13 {strides = array<i32>} : memref<3x256xf32, #tpu.memory_space<vmem>>, vector<3x256xf32>,
    return
  }
  func.func @transform_0(%arg0: i32) -> (i32, i32) {
    %c0_i32 = arith.constant 0 : i32
    %c0_i32_0 = arith.constant 0 : i32
    return %c0_i32, %arg0 : i32, i32
  }
  func.func @transform_1(%arg0: i32) -> (i32, i32) {
    %c0_i32 = arith.constant 0 : i32
    %c0_i32_0 = arith.constant 0 : i32
    %c0_i32_1 = arith.constant 0 : i32
    return %c0_i32, %c0_i32_0 : i32, i32
  }
  func.func @transform_2(%arg0: i32) -> (i32, i32) {
    %c0_i32 = arith.constant 0 : i32
    %c0_i32_0 = arith.constant 0 : i32
    %c0_i32_1 = arith.constant 0 : i32
    return %c0_i32, %c0_i32_0 : i32, i32
  }
  func.func @transform_3(%arg0: i32) -> (i32, i32) {
    %c0_i32 = arith.constant 0 : i32
    %c0_i32_0 = arith.constant 0 : i32
    %c0_i32_1 = arith.constant 0 : i32
    return %c0_i32, %c0_i32_0 : i32, i32
  }
  func.func @transform_4(%arg0: i32) -> (i32, i32) {
    %c0_i32 = arith.constant 0 : i32
    %c0_i32_0 = arith.constant 0 : i32
    %c0_i32_1 = arith.constant 0 : i32
    return %c0_i32, %c0_i32_0 : i32, i32
  }
  func.func @transform_5(%arg0: i32) -> (i32, i32) {
    %c0_i32 = arith.constant 0 : i32
    %c0_i32_0 = arith.constant 0 : i32
    return %c0_i32, %arg0 : i32, i32
  }
}

</mosaic_0001>

<llo_original>
// kernel: tpu_custom_call.1
$region0: #{tpu_custom_call.1}
  #allocation0 [shape = 'u32[]', space=smem, size = 0x4, offset = 0x4, fixed_abs, tag = 'smem constant byte address 0x4 - core index']
  #allocation1 [shape = 'u32[72,128]{1,0:T(1,128)}', space=vmem, size = 0x9000, scoped, tag = 'internal scratch']
  %s0 = inlined_call_operand.vmem [shape: bf16[4,256], index: 0, kind: input, shape index: {}]
  %s1 = inlined_call_operand.vmem [shape: bf16[10,4], index: 1, kind: input, shape index: {}]
  %s2 = inlined_call_operand.vmem [shape: f32[10,1], index: 2, kind: input, shape index: {}]
  %s3 = inlined_call_operand.vmem [shape: bf16[3,10], index: 3, kind: input, shape index: {}]
  %s4 = inlined_call_operand.vmem [shape: f32[3,1], index: 4, kind: input, shape index: {}]
  %s5 = inlined_call_operand.hbm [shape: f32[3,256], index: 5, kind: output, shape index: {}]
  %s6 = sld [smem:[#allocation0]]
  $region30: #{tpu_custom_call.1} parent=0
    _
  %s8 = ssub.s32 1, %s6
  %s9 = scalar_select 0, %s8, %s6
  $region1: #{tpu_custom_call.1} parent=0
    #allocation2 [shape = 'u8[4096]{0}', space=vmem, size = 0x1000, scoped, tag = 'output window, operand 0, single buffered']
    #allocation3 [shape = 's32[1]{0}', space=sflag, size = 0x4, scoped, tag = 'scoped memory for tpu_custom_call.1']
    %10 = vsyncpa [#allocation3], 0
    // Predicated region
    $region2: #{tpu_custom_call.1} parent=1 // pred_check
      _
    $region3: #{tpu_custom_call.1} parent=1 // pred_check_branch
      %12 = sbr.rel (0) target = $region5
    $region4: #{tpu_custom_call.1} parent=1 // pred_region
      _
    $region5: #{tpu_custom_call.1} parent=1 // pred_fallthru
      _
    // Predicated region
    $region6: #{tpu_custom_call.1} parent=1 // pred_check
      _
    $region7: #{tpu_custom_call.1} parent=1 // pred_check_branch
      %14 = sbr.rel (0) target = $region9
    $region8: #{tpu_custom_call.1} parent=1 // pred_region
      _
    $region9: #{tpu_custom_call.1} parent=1 // pred_fallthru
      _
    // Predicated region
    $region10: #{tpu_custom_call.1} parent=1 // pred_check
      _
    $region11: #{tpu_custom_call.1} parent=1 // pred_check_branch
      %16 = sbr.rel (0) target = $region13
    $region12: #{tpu_custom_call.1} parent=1 // pred_region
      _
    $region13: #{tpu_custom_call.1} parent=1 // pred_fallthru
      _
    // Predicated region
    $region14: #{tpu_custom_call.1} parent=1 // pred_check
      _
    $region15: #{tpu_custom_call.1} parent=1 // pred_check_branch
      %18 = sbr.rel (0) target = $region17
    $region16: #{tpu_custom_call.1} parent=1 // pred_region
      _
    $region17: #{tpu_custom_call.1} parent=1 // pred_fallthru
      _
    // Predicated region
    $region18: #{tpu_custom_call.1} parent=1 // pred_check
      _
    $region19: #{tpu_custom_call.1} parent=1 // pred_check_branch
      %20 = sbr.rel (0) target = $region21
    $region20: #{tpu_custom_call.1} parent=1 // pred_region
      _
    $region21: #{tpu_custom_call.1} parent=1 // pred_fallthru
      _
    %v22 = vld [vmem:[%s0] sm:$0xf]
    %v23 = vld [vmem:[%s1] sm:$0xf]
    %v24 = vld [vmem:[%s1 + $0x4] sm:$0x1]
    %v25 = vld [vmem:[%s3] sm:$0x3]
    %v26 = vld [vmem:[%s2] sm:$0xff]
    %v27 = vld [vmem:[%s2 + $0x8] sm:$0x3]
    %29 = vset.pattern.permute.xlu0 0
    %30 = vperm.xlu0 %29, %v26
    %v31 = vpop.permute.xlu0 %30
    %34 = vset.pattern.permute.xlu0 0
    %35 = vperm.xlu0 %34, %v27
    %v36 = vpop.permute.xlu0 %35
    %v40 = vunpack.c.l.b16 %v23
    %v41 = vunpack.c.l.b16 %v24
    %v42 = vpack.c.b16 %v41, %v40
    %44 = vst [vmem:[#allocation1] ss:$4 sm:$0xff] %v22
    %v45 = vld.sshfl [vmem:[#allocation1] sm:$0xff pattern:$0x73625140]
    %v46 = vld.sshfl [vmem:[#allocation1 + $0x8] sm:$0xff pattern:$0x73625140]
    %vm47 = vcmask 31744
    %v49 = vsel %vm47, %v42, 0
    %vm51 = vcmask 1041408
    %v52 = vsel %vm51, %v45, 0
    %v54 = vsel %vm51, %v46, 0
    %56 = vmatpush.bf16.msra.mxu0 0
    %57 = vmatpush.bf16.msra.mxu0 0
    %58 = vmatpush.bf16.msra.mxu0 0
    %59 = vmatpush.bf16.msra.mxu0 0
    %60 = vmatpush.bf16.msra.mxu0 0
    %61 = vmatpush.bf16.msra.mxu0 0
    %62 = vmatpush.bf16.msra.mxu0 0
    %63 = vmatpush.bf16.msra.mxu0 %v52
    %64 = vmatmul.bf16.gmra.mxu0 %v49
    %v65 = vpop.f32.mrf.mxu0
    %v66 = vadd.f32 %v31, %v65
    %v67 = vpop.f32.mrf.mxu0
    %v68 = vadd.f32 %v36, %v67
    %69 = vdwg.mxu0
    %70 = vmatpush.bf16.msra.mxu0 0
    %71 = vmatpush.bf16.msra.mxu0 0
    %72 = vmatpush.bf16.msra.mxu0 0
    %73 = vmatpush.bf16.msra.mxu0 0
    %74 = vmatpush.bf16.msra.mxu0 0
    %75 = vmatpush.bf16.msra.mxu0 0
    %76 = vmatpush.bf16.msra.mxu0 0
    %77 = vmatpush.bf16.msra.mxu0 %v54
    %78 = vmatmul.bf16.gmra.mxu0 %v49
    %v79 = vpop.f32.mrf.mxu0
    %v80 = vadd.f32 %v31, %v79
    %v81 = vpop.f32.mrf.mxu0
    %v82 = vadd.f32 %v36, %v81
    %83 = vdwg.mxu0
    %v84 = vmax.f32 %v66, 0.0
    %v85 = vmax.f32 %v80, 0.0
    %v86 = vmax.f32 %v68, 0.0
    %v87 = vmax.f32 %v82, 0.0
    %v88 = vpack.c.bf16 %v86, %v84
    %v89 = vpack.c.bf16 %v87, %v85
    %v90 = vld [vmem:[%s4] sm:$0x7]
    %92 = vset.pattern.permute.xlu0 0
    %93 = vperm.xlu0 %92, %v90
    %v94 = vpop.permute.xlu0 %93
    %vm96 = vcmask 80896
    %v98 = vsel %vm96, %v25, 0
    %vm100 = vcmask 1044480
    %v102 = vsel %vm100, %v88, 0
    %v105 = vsel %vm100, %v89, 0
    %107 = vmatpush.bf16.msra.mxu0 0
    %108 = vmatpush.bf16.msra.mxu0 0
    %109 = vmatpush.bf16.msra.mxu0 0
    %110 = vmatpush.bf16.msra.mxu0 0
    %111 = vmatpush.bf16.msra.mxu0 0
    %112 = vmatpush.bf16.msra.mxu0 0
    %113 = vmatpush.bf16.msra.mxu0 0
    %114 = vmatpush.bf16.msra.mxu0 %v102
    %115 = vmatmul.bf16.gmra.mxu0 %v98
    %v116 = vpop.f32.mrf.mxu0
    %v117 = vadd.f32 %v94, %v116
    %v118 = vpop.f32.mrf.mxu0
    %119 = vdwg.mxu0
    %120 = vmatpush.bf16.msra.mxu0 0
    %121 = vmatpush.bf16.msra.mxu0 0
    %122 = vmatpush.bf16.msra.mxu0 0
    %123 = vmatpush.bf16.msra.mxu0 0
    %124 = vmatpush.bf16.msra.mxu0 0
    %125 = vmatpush.bf16.msra.mxu0 0
    %126 = vmatpush.bf16.msra.mxu0 0
    %127 = vmatpush.bf16.msra.mxu0 %v105
    %128 = vmatmul.bf16.gmra.mxu0 %v98
    %v129 = vpop.f32.mrf.mxu0
    %v130 = vadd.f32 %v94, %v129
    %v131 = vpop.f32.mrf.mxu0
    %132 = vdwg.mxu0
    %v135 = vrot.slane %v130, 4
    %vm136 = vcmask 1043456
    %v137 = vsel %vm136, %v117, %v135
    %139 = vst [vmem:[#allocation2] sm:$0x77] %v137
    // Predicated region
    $region22: #{tpu_custom_call.1} parent=1 // pred_check
      _
    $region23: #{tpu_custom_call.1} parent=1 // pred_check_branch
      %141 = sbr.rel (0) target = $region25
    $region24: #{tpu_custom_call.1} parent=1 // pred_region
      %143 = vsyncadd [#allocation3], 0
      %s145 = sshll.u32 [#allocation2], 4
      %s146 = int_to_ptr.vmem [resolvable:$true] %s145
      %s147 = sshll.u32 %s5, 4
      %s148 = int_to_ptr.hbm [resolvable:$true] %s147
      %150 = dma.vmem_to_hbm [thread:$0]  %s146, 128, %s148, [#allocation3]
    $region25: #{tpu_custom_call.1} parent=1 // pred_fallthru
      _
    // Predicated region
    $region26: #{tpu_custom_call.1} parent=1 // pred_check
      _
    $region27: #{tpu_custom_call.1} parent=1 // pred_check_branch
      %152 = sbr.rel (0) target = $region29
    $region28: #{tpu_custom_call.1} parent=1 // pred_region
      %154 = dma.done [#allocation3], 128
    $region29: #{tpu_custom_call.1} parent=1 // pred_fallthru
      _
    %155 = vsyncpa [#allocation3], 1

</llo_original>
